<compile_context>
chip_gen: v5e
topology: v5e:2x2
jax: 0.10.0
libtpu: 0.0.40
codegen_flags: <defaults>
</compile_context>

<pallas_src>
import functools

import jax
import jax.numpy as jnp
from jax import lax
from jax.experimental import pallas as pl
from jax.experimental.pallas import tpu as pltpu


_ROW_CHUNK = 128  # rows of the batch tile processed per MXU pass inside the kernel


def _round_up(x, m):
    return ((x + m - 1) // m) * m


def _normalize_tb(tb, pack, rc=_ROW_CHUNK):
    """Round the batch tile to the sublane packing; make it a multiple of the
    in-kernel row chunk once it exceeds one chunk so the chunk loop tiles evenly."""
    tb = max(pack, _round_up(tb, pack))
    if tb > rc:
        tb = (tb // rc) * rc
    return tb


def _vmem_capacity_bytes():
    try:
        return int(pltpu.get_tpu_info().vmem_capacity_bytes)
    except Exception:
        return 64 << 20  # conservative (v7x per-TensorCore VMEM)


def _mlp_points_fc_kernel(x_ref, w1_ref, b1_ref, w2_ref, b2_ref, o_ref, *, row_chunk):
    # Weights / biases are VMEM-resident (constant index maps); load them once.
    w1 = w1_ref[...]
    b1 = b1_ref[...]           # (1, D)  f32
    w2 = w2_ref[...]
    b2 = b2_ref[...]           # (1, O_pad) f32

    tb = x_ref.shape[0]
    n_chunks = tb // row_chunk  # static; tb is a multiple of row_chunk by construction

    def compute_chunk(r):
        xc = x_ref[pl.ds(r, row_chunk), :]
        # fc1 on the MXU, f32 accumulation; bias + ReLU in f32 on the VPU.
        h = jnp.dot(xc, w1, preferred_element_type=jnp.float32)
        h = jnp.maximum(h + b1, 0.0)
        # fc2: feed the in-vreg fc1 result straight back to the MXU (no VMEM
        # round-trip).  Cast to the matmul compute dtype (no-op on the f32 path).
        y = jnp.dot(h.astype(w2.dtype), w2, preferred_element_type=jnp.float32)
        o_ref[pl.ds(r, row_chunk), :] = (y + b2).astype(o_ref.dtype)

    if n_chunks == 1:
        compute_chunk(0)
    else:
        def body(c, carry):
            compute_chunk(pl.multiple_of(c * row_chunk, row_chunk))
            return carry
        lax.fori_loop(0, n_chunks, body, 0, unroll=True)


def mlp_points_fc(x, w1, b1, w2, b2, out_dim, num_points, *,
                  compute_dtype=None, out_dtype=None, block_b=None,
                  xla_fallback_batch=0):
    """x: (B, desc_dim) -> (B, out_dim, num_points).

    compute_dtype: dtype fed to the MXU for both matmuls (default: x.dtype).
        Prefer jnp.bfloat16 on v6e/v7x — with K=D and N=out_dim*num_points fixed
        by the model, a large batch tile (M) is the only MXU-utilization lever,
        and bf16 operands unlock the fast MXU rate.  Accumulation / bias / ReLU
        stay in f32 either way.
    out_dtype: HBM output dtype (default: x.dtype).  bf16 halves the largest
        HBM stream of this memory-bound op if the consumer tolerates it.
    block_b: batch tile size (auto-chosen if None).
    xla_fallback_batch: if 0 < B <= this, skip the pallas_call and use plain XLA
        (at production B ~ 8 the op is launch-overhead bound and XLA fusion wins).
    """
    B, D = x.shape
    O = out_dim * num_points
    assert w1.shape == (D, D) and w2.shape == (D, O)
    assert b1.reshape(-1).shape[0] == D and b2.reshape(-1).shape[0] == O

    out_dtype = jnp.dtype(out_dtype or x.dtype)
    compute_dtype = jnp.dtype(compute_dtype or x.dtype)

    # ---- small-batch fallback (launch-overhead bound regime) ---------------
    if 0 < B <= xla_fallback_batch:
        h = jnp.maximum(
            x.astype(jnp.float32) @ w1.astype(jnp.float32)
            + b1.reshape(1, D).astype(jnp.float32), 0.0)
        y = h @ w2.astype(jnp.float32) + b2.reshape(1, O).astype(jnp.float32)
        return y.astype(out_dtype).reshape(-1, out_dim, num_points)

    # ---- batch tiling -------------------------------------------------------
    pack = 16 if compute_dtype == jnp.bfloat16 else 8   # sublane packing
    B_align = _round_up(B, pack)

    if block_b is None:
        # bf16 tiles are half the bytes and ~4x the MXU rate -> equal-or-larger TB.
        tb = 1024 if compute_dtype == jnp.bfloat16 else 512
        # Guarantee >= 2 grid steps when the batch allows it so the "parallel"
        # axis can be split across v7x's two TensorCores.
        if B_align >= 2 * pack:
            tb = min(tb, _round_up(B_align // 2, pack))
        tb = min(tb, B_align)
    else:
        tb = block_b
    TB = _normalize_tb(tb, pack)

    # ---- lane-dense output: pad O to a multiple of 128 ----------------------
    O_pad = _round_up(O, 128)

    # ---- VMEM budget (generation-aware) -------------------------------------
    c_size = compute_dtype.itemsize
    o_size = out_dtype.itemsize
    # Weights/biases are double-buffered by default even with constant index
    # maps; count them twice so the limit is never below actual usage.
    # (TODO: single-buffer them via pipeline_mode=pl.Buffered(1) to free VMEM
    #  for bigger activation tiles at large desc_dim.)
    w_bytes = 2 * ((D * D + D * O_pad) * c_size + (D + O_pad) * 4)
    tiles_bytes = lambda t: 2 * t * (D * c_size + O_pad * o_size)  # x + out, 2 bufs
    margin = 4 << 20
    cap = _vmem_capacity_bytes() - (16 << 20)   # headroom for Mosaic scratch/sems
    while TB > pack and w_bytes + tiles_bytes(TB) + margin > cap:
        TB = _normalize_tb(TB // 2, pack)
    vmem_limit = int(min(max(w_bytes + tiles_bytes(TB) + margin, 16 << 20), cap))

    B_pad = _round_up(B, TB)
    grid = (B_pad // TB,)

    # ---- operand prep --------------------------------------------------------
    x_c = x.astype(compute_dtype)
    if B_pad != B:
        x_c = jnp.pad(x_c, ((0, B_pad - B), (0, 0)))
    w1_c = w1.astype(compute_dtype)
    b1_f = b1.reshape(1, D).astype(jnp.float32)
    w2_c = w2.astype(compute_dtype)
    b2_f = b2.reshape(1, O).astype(jnp.float32)
    if O_pad != O:
        w2_c = jnp.pad(w2_c, ((0, 0), (0, O_pad - O)))
        b2_f = jnp.pad(b2_f, ((0, 0), (0, O_pad - O)))

    cost = pl.CostEstimate(
        flops=2 * B_pad * D * D + 2 * B_pad * D * O_pad,
        transcendentals=0,
        bytes_accessed=(B_pad * D * c_size
                        + (D * D + D * O_pad) * c_size + (D + O_pad) * 4
                        + B_pad * O_pad * o_size),
    )

    kernel = functools.partial(_mlp_points_fc_kernel, row_chunk=min(TB, _ROW_CHUNK))

    y = pl.pallas_call(
        kernel,
        out_shape=jax.ShapeDtypeStruct((B_pad, O_pad), out_dtype),
        grid_spec=pltpu.PrefetchScalarGridSpec(
            num_scalar_prefetch=0,
            grid=grid,
            in_specs=[
                # activation tile walks the batch; weights/biases stay resident
                pl.BlockSpec((TB, D), lambda i: (i, 0)),
                pl.BlockSpec((D, D), lambda i: (0, 0)),
                pl.BlockSpec((1, D), lambda i: (0, 0)),
                pl.BlockSpec((D, O_pad), lambda i: (0, 0)),
                pl.BlockSpec((1, O_pad), lambda i: (0, 0)),
            ],
            out_specs=pl.BlockSpec((TB, O_pad), lambda i: (i, 0)),
        ),
        compiler_params=pltpu.CompilerParams(
            dimension_semantics=("parallel",),
            vmem_limit_bytes=vmem_limit,
        ),
        cost_estimate=cost,
    )(x_c, w1_c, b1_f, w2_c, b2_f)

    # glue: drop batch/lane padding, then torch-style .reshape(-1, out_dim, num_points)
    y = y[:B, :O]
    return y.reshape(-1, out_dim, num_points)


if __name__ == "__main__":
    # Small, TPU-friendly shapes consistent with the module.
    B = 24
    desc_dim = 128
    num_points = 16
    out_dim = 8
    O = out_dim * num_points  # 128

    key = jax.random.PRNGKey(0)
    kx, k1, kb1, k2, kb2, k3, kb3 = jax.random.split(key, 7)

    x = jax.random.normal(kx, (B, desc_dim), dtype=jnp.float32)

    # Deterministic synthetic parameters, stored as (in, out) == W^T relative
    # to PyTorch's (out, in) convention.
    w1 = jax.random.normal(k1, (desc_dim, desc_dim), dtype=jnp.float32) * 0.05
    b1 = jax.random.normal(kb1, (desc_dim,), dtype=jnp.float32) * 0.05
    w2 = jax.random.normal(k2, (desc_dim, O), dtype=jnp.float32) * 0.05
    b2 = jax.random.normal(kb2, (O,), dtype=jnp.float32) * 0.05

    # Pure-JAX reference of the forward semantics.
    ref = (jnp.maximum(x @ w1 + b1[None, :], 0.0) @ w2
           + b2[None, :]).reshape(-1, out_dim, num_points)

    # ---- f32, auto tiling: >=2 grid steps (megacore-friendly), no scratch ----
    pts = mlp_points_fc(x, w1, b1, w2, b2, out_dim, num_points)
    pts = jax.block_until_ready(pts)
    assert pts.shape == (B, out_dim, num_points)
    assert jnp.allclose(pts, ref, atol=1e-4, rtol=1e-4)

    # ---- bf16 matmul operands, f32 accumulation (v6e/v7x fast path) ----------
    pts_bf16 = mlp_points_fc(x, w1, b1, w2, b2, out_dim, num_points,
                             compute_dtype=jnp.bfloat16, block_b=16)
    pts_bf16 = jax.block_until_ready(pts_bf16)
    assert pts_bf16.shape == (B, out_dim, num_points)
    assert jnp.allclose(pts_bf16, ref, atol=5e-2, rtol=5e-2)

    # ---- large batch tile: exercises the in-kernel row-chunk loop ------------
    pts_big = mlp_points_fc(x, w1, b1, w2, b2, out_dim, num_points, block_b=256)
    pts_big = jax.block_until_ready(pts_big)
    assert pts_big.shape == (B, out_dim, num_points)
    assert jnp.allclose(pts_big, ref, atol=1e-4, rtol=1e-4)

    # ---- out_dim*num_points not a multiple of 128: lane-dense padding path ---
    out_dim2 = 5
    O2 = out_dim2 * num_points  # 80 -> padded to 128 inside the wrapper
    w2b = jax.random.normal(k3, (desc_dim, O2), dtype=jnp.float32) * 0.05
    b2b = jax.random.normal(kb3, (O2,), dtype=jnp.float32) * 0.05
    ref2 = (jnp.maximum(x @ w1 + b1[None, :], 0.0) @ w2b
            + b2b[None, :]).reshape(-1, out_dim2, num_points)
    pts2 = mlp_points_fc(x, w1, b1, w2b, b2b, out_dim2, num_points)
    pts2 = jax.block_until_ready(pts2)
    assert pts2.shape == (B, out_dim2, num_points)
    assert jnp.allclose(pts2, ref2, atol=1e-4, rtol=1e-4)

    print("KERNEL_OK")
</pallas_src>

<mosaic_0001>
module attributes {stable_mosaic.version = 11 : i64} {
  func.func @_mlp_points_fc_kernel(%arg0: i32, %arg1: memref<16x128xf32, #tpu.memory_space<vmem>>, %arg2: memref<128x128xf32, #tpu.memory_space<vmem>>, %arg3: memref<1x128xf32, #tpu.memory_space<vmem>>, %arg4: memref<128x128xf32, #tpu.memory_space<vmem>>, %arg5: memref<1x128xf32, #tpu.memory_space<vmem>>, %arg6: memref<16x128xf32, #tpu.memory_space<vmem>>) attributes {dimension_semantics = [#tpu.dimension_semantics<parallel>], iteration_bounds = array<i64: 2>, scalar_prefetch = 0 : i64, scratch_operands = 0 : i64, tpu.core_type = #tpu.core_type<tc>, window_params = [{transform_indices = @transform_0, window_bounds = array<i64: 16, 128>}, {pipeline_mode = #tpu.pipeline_mode<synchronous>, transform_indices = @transform_1, window_bounds = array<i64: 128, 128>}, {pipeline_mode = #tpu.pipeline_mode<synchronous>, transform_indices = @transform_2, window_bounds = array<i64: 1, 128>}, {pipeline_mode = #tpu.pipeline_mode<synchronous>, transform_indices = @transform_3, window_bounds = array<i64: 128, 128>}, {pipeline_mode = #tpu.pipeline_mode<synchronous>, transform_indices = @transform_4, window_bounds = array<i64: 1, 128>}, {transform_indices = @transform_5, window_bounds = array<i64: 16, 128>}]} {
    %c0 = arith.constant 0 : index
    %c0_0 = arith.constant 0 : index
    %0 = vector.load %arg2[%c0, %c0_0] : memref<128x128xf32, #tpu.memory_space<vmem>>, vector<128x128xf32>
    %c0_1 = arith.constant 0 : index
    %c0_2 = arith.constant 0 : index
    %1 = vector.load %arg3[%c0_1, %c0_2] : memref<1x128xf32, #tpu.memory_space<vmem>>, vector<1x128xf32>
    %c0_3 = arith.constant 0 : index
    %c0_4 = arith.constant 0 : index
    %2 = vector.load %arg4[%c0_3, %c0_4] : memref<128x128xf32, #tpu.memory_space<vmem>>, vector<128x128xf32>
    %c0_5 = arith.constant 0 : index
    %c0_6 = arith.constant 0 : index
    %3 = vector.load %arg5[%c0_5, %c0_6] : memref<1x128xf32, #tpu.memory_space<vmem>>, vector<1x128xf32>
    %c0_7 = arith.constant 0 : index
    %c0_8 = arith.constant 0 : index
    %4 = vector.load %arg1[%c0_7, %c0_8] : memref<16x128xf32, #tpu.memory_space<vmem>>, vector<16x128xf32>
    %cst = arith.constant dense<0.000000e+00> : vector<16x128xf32>
    %5 = tpu.matmul %4, %0, %cst {dimension_numbers = #tpu.dot_dimension_numbers<[1], [0], [0], [1], [0, 0, 1, 1], [], []>} : vector<16x128xf32>, vector<128x128xf32>, vector<16x128xf32> -> vector<16x128xf32>
    %6 = vector.broadcast %1 : vector<1x128xf32> to vector<16x128xf32>
    %7 = arith.addf %5, %6 : vector<16x128xf32>
    %cst_9 = arith.constant 0.000000e+00 : f32
    %8 = vector.broadcast %cst_9 : f32 to vector<16x128xf32>
    %9 = arith.maximumf %7, %8 : vector<16x128xf32>
    %cst_10 = arith.constant dense<0.000000e+00> : vector<16x128xf32>
    %10 = tpu.matmul %9, %2, %cst_10 {dimension_numbers = #tpu.dot_dimension_numbers<[1], [0], [0], [1], [0, 0, 1, 1], [], []>} : vector<16x128xf32>, vector<128x128xf32>, vector<16x128xf32> -> vector<16x128xf32>
    %11 = vector.broadcast %3 : vector<1x128xf32> to vector<16x128xf32>
    %12 = arith.addf %10, %11 : vector<16x128xf32>
    %c0_11 = arith.constant 0 : index
    %c0_12 = arith.constant 0 : index
    %13 = vector.load %arg6[%c0_11, %c0_12] : memref<16x128xf32, #tpu.memory_space<vmem>>, vector<16x128xf32>
    tpu.vector_store %arg6[%c0_11, %c0_12], %12 {strides = array<i32>} : memref<16x128xf32, #tpu.memory_space<vmem>>, vector<16x128xf32>,
    return
  }
  func.func @transform_0(%arg0: i32) -> (i32, i32) {
    %c0_i32 = arith.constant 0 : i32
    %c0_i32_0 = arith.constant 0 : i32
    return %arg0, %c0_i32 : i32, i32
  }
  func.func @transform_1(%arg0: i32) -> (i32, i32) {
    %c0_i32 = arith.constant 0 : i32
    %c0_i32_0 = arith.constant 0 : i32
    %c0_i32_1 = arith.constant 0 : i32
    return %c0_i32, %c0_i32_0 : i32, i32
  }
  func.func @transform_2(%arg0: i32) -> (i32, i32) {
    %c0_i32 = arith.constant 0 : i32
    %c0_i32_0 = arith.constant 0 : i32
    %c0_i32_1 = arith.constant 0 : i32
    return %c0_i32, %c0_i32_0 : i32, i32
  }
  func.func @transform_3(%arg0: i32) -> (i32, i32) {
    %c0_i32 = arith.constant 0 : i32
    %c0_i32_0 = arith.constant 0 : i32
    %c0_i32_1 = arith.constant 0 : i32
    return %c0_i32, %c0_i32_0 : i32, i32
  }
  func.func @transform_4(%arg0: i32) -> (i32, i32) {
    %c0_i32 = arith.constant 0 : i32
    %c0_i32_0 = arith.constant 0 : i32
    %c0_i32_1 = arith.constant 0 : i32
    return %c0_i32, %c0_i32_0 : i32, i32
  }
  func.func @transform_5(%arg0: i32) -> (i32, i32) {
    %c0_i32 = arith.constant 0 : i32
    %c0_i32_0 = arith.constant 0 : i32
    return %arg0, %c0_i32 : i32, i32
  }
}

</mosaic_0001>

<llo_original>
// kernel: tpu_custom_call.1
$region0: #{tpu_custom_call.1}
  #allocation0 [shape = 'u32[]', space=smem, size = 0x4, offset = 0x4, fixed_abs, tag = 'smem constant byte address 0x4 - core index']
  #allocation1 [shape = 'u32[72,128]{1,0:T(1,128)}', space=vmem, size = 0x9000, scoped, tag = 'internal scratch']
  %s0 = inlined_call_operand.hbm [shape: f32[32,128], index: 0, kind: input, shape index: {}]
  %s1 = inlined_call_operand.hbm [shape: f32[128,128], index: 1, kind: input, shape index: {}]
  %s2 = inlined_call_operand.vmem [shape: f32[1,128], index: 2, kind: input, shape index: {}]
  %s3 = inlined_call_operand.hbm [shape: f32[128,128], index: 3, kind: input, shape index: {}]
  %s4 = inlined_call_operand.vmem [shape: f32[1,128], index: 4, kind: input, shape index: {}]
  %s5 = inlined_call_operand.hbm [shape: f32[32,128], index: 5, kind: output, shape index: {}]
  %s6 = sld [smem:[#allocation0]]
  $region65: #{tpu_custom_call.1} parent=0
    _
  %s8 = ssub.s32 1, %s6
  %s9 = scalar_select 0, %s8, %s6
  $region1: #{tpu_custom_call.1} parent=0
    #allocation2 [shape = 'u8[16384]{0}', space=vmem, size = 0x4000, scoped, tag = 'input window, operand 0']
    #allocation3 [shape = 's32[2]{0}', space=sflag, size = 0x8, scoped, tag = 'scoped memory for tpu_custom_call.1']
    #allocation4 [shape = 's32[2]{0}', space=sflag, size = 0x8, scoped, tag = 'scoped memory for tpu_custom_call.1']
    #allocation5 [shape = 'u8[65536]{0}', space=vmem, size = 0x10000, scoped, tag = 'input window, operand 1, single buffered']
    #allocation6 [shape = 's32[1]{0}', space=sflag, size = 0x4, scoped, tag = 'scoped memory for tpu_custom_call.1']
    #allocation7 [shape = 'u8[65536]{0}', space=vmem, size = 0x10000, scoped, tag = 'input window, operand 3, single buffered']
    #allocation8 [shape = 'u8[16384]{0}', space=vmem, size = 0x4000, scoped, tag = 'output window, operand 0']
    %10 = vsyncpa [#allocation3], 0
    %s11 = scalar_lea.sflag [#allocation3], 1
    %12 = vsyncpa %s11, 0
    %13 = vsyncpa [#allocation6], 0
    %14 = vsyncpa [#allocation4], 0
    %s15 = scalar_lea.sflag [#allocation4], 1
    %16 = vsyncpa %s15, 0
    loop: start=0, step=1, limit=4
    $region2: #{tpu_custom_call.1} parent=1 // loop_pre_header
      _
    $region3: #{tpu_custom_call.1} parent=1 // loop_header
      %s18 = sphi 0, %s22
      %p19 = scmp.ge.s32.totalorder %s18, 4
      %s28 = sphi 0, %s30
      %s31 = sphi 0, %s28
      %s32 = sphi 0, %s31
      %s48 = sphi 0, %s32
      %s52 = sphi 0, %s52
      %s54 = sphi 0, %s52
      %s55 = sphi 0, %s54
      %s69 = sphi 0, %s55
      %s73 = sphi 0, %s73
      %s75 = sphi 0, %s73
      %s76 = sphi 0, %s75
      %s90 = sphi 0, %s76
      %s94 = sphi 0, %s94
      %s96 = sphi 0, %s94
      %s97 = sphi 0, %s96
      %s111 = sphi 0, %s97
      %s115 = sphi 0, %s115
      %s117 = sphi 0, %s115
      %s118 = sphi 0, %s117
      %s132 = sphi 0, %s118
      %s138 = sphi 0, %s140
      %s141 = sphi 0, %s138
      %s142 = sphi 0, %s141
      %s158 = sphi 0, %s142
    $region4: #{tpu_custom_call.1} parent=1 // loop_header_branch
      %21 = sbr.rel (%p19) target = $region8
    $region5: #{tpu_custom_call.1} parent=1 // loop_body
      %s23 = ssub.s32 %s18, 1
      %s24 = ssub.s32 %s18, 2
      %s25 = sadd.s32 %s18, 1
      %s26 = ssub.s32 %s18, %s25
      %p27 = scmp.eq.s32.totalorder %s26, 0
      %s29 = sadd.s32 %s28, 1
      %s30 = scalar_select %p27, %s28, %s29
      %p33 = pneg %p27
      %p34 = scmp.eq.s32.totalorder %s18, 1
      %p35 = por %p33, %p34
      %p36 = scmp.ne.s32.totalorder %s28, %s31
      %p37 = scmp.eq.s32.totalorder %s18, 0
      %p38 = por %p36, %p37
      %p39 = scmp.ne.s32.totalorder %s28, %s31
      %p40 = scmp.eq.s32.totalorder %s23, 1
      %p41 = por %p39, %p40
      %p42 = scmp.ne.s32.totalorder %s31, %s32
      %p43 = scmp.eq.s32.totalorder %s23, 0
      %p44 = por %p42, %p43
      %p45 = scmp.ne.s32.totalorder %s31, %s32
      %p46 = scmp.eq.s32.totalorder %s24, 1
      %p47 = por %p45, %p46
      %p49 = scmp.ne.s32.totalorder %s32, %s48
      %p50 = scmp.eq.s32.totalorder %s24, 0
      %p51 = por %p49, %p50
      %s53 = sadd.s32 %s52, 1
      %p56 = scmp.eq.s32.totalorder %s18, 1
      %p57 = scmp.ne.s32.totalorder %s52, %s54
      %p58 = scmp.eq.s32.totalorder %s18, 0
      %p59 = por %p57, %p58
      %p60 = scmp.ne.s32.totalorder %s52, %s54
      %p61 = scmp.eq.s32.totalorder %s23, 1
      %p62 = por %p60, %p61
      %p63 = scmp.ne.s32.totalorder %s54, %s55
      %p64 = scmp.eq.s32.totalorder %s23, 0
      %p65 = por %p63, %p64
      %p66 = scmp.ne.s32.totalorder %s54, %s55
      %p67 = scmp.eq.s32.totalorder %s24, 1
      %p68 = por %p66, %p67
      %p70 = scmp.ne.s32.totalorder %s55, %s69
      %p71 = scmp.eq.s32.totalorder %s24, 0
      %p72 = por %p70, %p71
      %s74 = sadd.s32 %s73, 1
      %p77 = scmp.eq.s32.totalorder %s18, 1
      %p78 = scmp.ne.s32.totalorder %s73, %s75
      %p79 = scmp.eq.s32.totalorder %s18, 0
      %p80 = por %p78, %p79
      %p81 = scmp.ne.s32.totalorder %s73, %s75
      %p82 = scmp.eq.s32.totalorder %s23, 1
      %p83 = por %p81, %p82
      %p84 = scmp.ne.s32.totalorder %s75, %s76
      %p85 = scmp.eq.s32.totalorder %s23, 0
      %p86 = por %p84, %p85
      %p87 = scmp.ne.s32.totalorder %s75, %s76
      %p88 = scmp.eq.s32.totalorder %s24, 1
      %p89 = por %p87, %p88
      %p91 = scmp.ne.s32.totalorder %s76, %s90
      %p92 = scmp.eq.s32.totalorder %s24, 0
      %p93 = por %p91, %p92
      %s95 = sadd.s32 %s94, 1
      %p98 = scmp.eq.s32.totalorder %s18, 1
      %p99 = scmp.ne.s32.totalorder %s94, %s96
      %p100 = scmp.eq.s32.totalorder %s18, 0
      %p101 = por %p99, %p100
      %p102 = scmp.ne.s32.totalorder %s94, %s96
      %p103 = scmp.eq.s32.totalorder %s23, 1
      %p104 = por %p102, %p103
      %p105 = scmp.ne.s32.totalorder %s96, %s97
      %p106 = scmp.eq.s32.totalorder %s23, 0
      %p107 = por %p105, %p106
      %p108 = scmp.ne.s32.totalorder %s96, %s97
      %p109 = scmp.eq.s32.totalorder %s24, 1
      %p110 = por %p108, %p109
      %p112 = scmp.ne.s32.totalorder %s97, %s111
      %p113 = scmp.eq.s32.totalorder %s24, 0
      %p114 = por %p112, %p113
      %s116 = sadd.s32 %s115, 1
      %p119 = scmp.eq.s32.totalorder %s18, 1
      %p120 = scmp.ne.s32.totalorder %s115, %s117
      %p121 = scmp.eq.s32.totalorder %s18, 0
      %p122 = por %p120, %p121
      %p123 = scmp.ne.s32.totalorder %s115, %s117
      %p124 = scmp.eq.s32.totalorder %s23, 1
      %p125 = por %p123, %p124
      %p126 = scmp.ne.s32.totalorder %s117, %s118
      %p127 = scmp.eq.s32.totalorder %s23, 0
      %p128 = por %p126, %p127
      %p129 = scmp.ne.s32.totalorder %s117, %s118
      %p130 = scmp.eq.s32.totalorder %s24, 1
      %p131 = por %p129, %p130
      %p133 = scmp.ne.s32.totalorder %s118, %s132
      %p134 = scmp.eq.s32.totalorder %s24, 0
      %p135 = por %p133, %p134
      %s136 = ssub.s32 %s18, %s25
      %p137 = scmp.eq.s32.totalorder %s136, 0
      %s139 = sadd.s32 %s138, 1
      %s140 = scalar_select %p137, %s138, %s139
      %p143 = pneg %p137
      %p144 = scmp.eq.s32.totalorder %s18, 1
      %p145 = por %p143, %p144
      %p146 = scmp.ne.s32.totalorder %s138, %s141
      %p147 = scmp.eq.s32.totalorder %s18, 0
      %p148 = por %p146, %p147
      %p149 = scmp.ne.s32.totalorder %s138, %s141
      %p150 = scmp.eq.s32.totalorder %s23, 1
      %p151 = por %p149, %p150
      %p152 = scmp.ne.s32.totalorder %s141, %s142
      %p153 = scmp.eq.s32.totalorder %s23, 0
      %p154 = por %p152, %p153
      %p155 = scmp.ne.s32.totalorder %s141, %s142
      %p156 = scmp.eq.s32.totalorder %s24, 1
      %p157 = por %p155, %p156
      %p159 = scmp.ne.s32.totalorder %s142, %s158
      %p160 = scmp.eq.s32.totalorder %s24, 0
      %p161 = por %p159, %p160
      %p162 = scmp.le.s32.totalorder 1, %s18
      %p163 = scmp.lt.s32.totalorder %s18, 3
      %p164 = pnand %p162, %p163
      %p165 = pneg %p164
      // Predicated region
      $region9: #{tpu_custom_call.1} parent=5 // pred_check
        _
      $region10: #{tpu_custom_call.1} parent=5 // pred_check_branch
        %167 = sbr.rel (%p164) target = $region12
      $region11: #{tpu_custom_call.1} parent=5 // pred_region
        %s168 = ssub.s32 %s18, 1
        // Predicated region
        $region13: #{tpu_custom_call.1} parent=11 // pred_check
          %p169 = pneg %p65
        $region14: #{tpu_custom_call.1} parent=11 // pred_check_branch
          %171 = sbr.rel (%p169) target = $region16
        $region15: #{tpu_custom_call.1} parent=11 // pred_region
          %173 = vsyncadd [#allocation6], 0
          %s174 = sshll.u32 %s1, 4
          %s175 = int_to_ptr.hbm [resolvable:$true] %s174
          %s176 = sshll.u32 [#allocation5], 4
          %s177 = int_to_ptr.vmem [resolvable:$true] %s176
          %182 = dma.hbm_to_vmem [thread:$0]  %s175, 2048, %s177, [#allocation6], 128, 128, 8
        $region16: #{tpu_custom_call.1} parent=11 // pred_fallthru
          _
        // Predicated region
        $region17: #{tpu_custom_call.1} parent=11 // pred_check
          %p183 = pneg %p86
        $region18: #{tpu_custom_call.1} parent=11 // pred_check_branch
          %185 = sbr.rel (%p183) target = $region20
        $region19: #{tpu_custom_call.1} parent=11 // pred_region
          _
        $region20: #{tpu_custom_call.1} parent=11 // pred_fallthru
          _
        // Predicated region
        $region21: #{tpu_custom_call.1} parent=11 // pred_check
          %p186 = pneg %p107
        $region22: #{tpu_custom_call.1} parent=11 // pred_check_branch
          %188 = sbr.rel (%p186) target = $region24
        $region23: #{tpu_custom_call.1} parent=11 // pred_region
          %190 = vsyncadd [#allocation6], 0
          %s191 = sshll.u32 %s3, 4
          %s192 = int_to_ptr.hbm [resolvable:$true] %s191
          %s193 = sshll.u32 [#allocation7], 4
          %s194 = int_to_ptr.vmem [resolvable:$true] %s193
          %199 = dma.hbm_to_vmem [thread:$0]  %s192, 2048, %s194, [#allocation6], 128, 128, 8
        $region24: #{tpu_custom_call.1} parent=11 // pred_fallthru
          _
        // Predicated region
        $region25: #{tpu_custom_call.1} parent=11 // pred_check
          %p200 = pneg %p128
        $region26: #{tpu_custom_call.1} parent=11 // pred_check_branch
          %202 = sbr.rel (%p200) target = $region28
        $region27: #{tpu_custom_call.1} parent=11 // pred_region
          _
        $region28: #{tpu_custom_call.1} parent=11 // pred_fallthru
          _
      $region12: #{tpu_custom_call.1} parent=5 // pred_fallthru
        _
      %p203 = scmp.lt.s32.totalorder %s18, 2
      // Predicated region
      $region29: #{tpu_custom_call.1} parent=5 // pred_check
        %p204 = pneg %p203
      $region30: #{tpu_custom_call.1} parent=5 // pred_check_branch
        %206 = sbr.rel (%p204) target = $region32
      $region31: #{tpu_custom_call.1} parent=5 // pred_region
        // Predicated region
        $region33: #{tpu_custom_call.1} parent=31 // pred_check
          %p207 = pneg %p38
        $region34: #{tpu_custom_call.1} parent=31 // pred_check_branch
          %209 = sbr.rel (%p207) target = $region36
        $region35: #{tpu_custom_call.1} parent=31 // pred_region
          %s210 = sand.u32 %s28, 1
          %s211 = scalar_lea.sflag [#allocation3], %s210
          %s212 = sand.u32 %s28, 1
          %s213 = smul.addr %s212, 16
          %s214 = scalar_lea.vmem [#allocation2], %s213
          %s215 = smul.u32 2, %s18
          %217 = vsyncadd %s211, 0
          %s218 = smul.addr %s215, 8
          %s219 = scalar_lea.hbm %s0, %s218
          %s220 = sshll.u32 %s219, 4
          %s221 = int_to_ptr.hbm [resolvable:$true] %s220
          %s222 = sshll.u32 %s214, 4
          %s223 = int_to_ptr.vmem [resolvable:$true] %s222
          %228 = dma.hbm_to_vmem [thread:$0]  %s221, 256, %s223, %s211, 128, 128, 8
        $region36: #{tpu_custom_call.1} parent=31 // pred_fallthru
          _
      $region32: #{tpu_custom_call.1} parent=5 // pred_fallthru
        _
      %p229 = scmp.le.s32.totalorder 1, %s18
      %p230 = scmp.lt.s32.totalorder %s18, 3
      %p231 = pnand %p229, %p230
      %p232 = pneg %p231
      // Predicated region
      $region37: #{tpu_custom_call.1} parent=5 // pred_check
        _
      $region38: #{tpu_custom_call.1} parent=5 // pred_check_branch
        %234 = sbr.rel (%p231) target = $region40
      $region39: #{tpu_custom_call.1} parent=5 // pred_region
        %s235 = ssub.s32 %s18, 1
        %s236 = sand.u32 %s31, 1
        %s237 = scalar_lea.sflag [#allocation3], %s236
        %s238 = sand.u32 %s31, 1
        %s239 = smul.addr %s238, 16
        %s240 = scalar_lea.vmem [#allocation2], %s239
        // Predicated region
        $region41: #{tpu_custom_call.1} parent=39 // pred_check
          %p241 = pneg %p44
        $region42: #{tpu_custom_call.1} parent=39 // pred_check_branch
          %243 = sbr.rel (%p241) target = $region44
        $region43: #{tpu_custom_call.1} parent=39 // pred_region
          %245 = dma.done %s237, 256
        $region44: #{tpu_custom_call.1} parent=39 // pred_fallthru
          _
        // Predicated region
        $region45: #{tpu_custom_call.1} parent=39 // pred_check
          %p246 = pneg %p65
        $region46: #{tpu_custom_call.1} parent=39 // pred_check_branch
          %248 = sbr.rel (%p246) target = $region48
        $region47: #{tpu_custom_call.1} parent=39 // pred_region
          %250 = dma.done [#allocation6], 2048
        $region48: #{tpu_custom_call.1} parent=39 // pred_fallthru
          _
        // Predicated region
        $region49: #{tpu_custom_call.1} parent=39 // pred_check
          %p251 = pneg %p107
        $region50: #{tpu_custom_call.1} parent=39 // pred_check_branch
          %253 = sbr.rel (%p251) target = $region52
        $region51: #{tpu_custom_call.1} parent=39 // pred_region
          %255 = dma.done [#allocation6], 2048
        $region52: #{tpu_custom_call.1} parent=39 // pred_fallthru
          _
        %s256 = sand.u32 %s31, 1
        %s257 = scalar_lea.sflag [#allocation3], %s256
        %s258 = sand.u32 %s31, 1
        %s259 = smul.addr %s258, 16
        %s260 = scalar_lea.vmem [#allocation2], %s259
        %p261 = pneg %p44
        %p262 = pneg %p41
        %p263 = pneg %p65
        %p264 = pneg %p62
        %p265 = pneg %p86
        %p266 = pneg %p83
        %p267 = pneg %p107
        %p268 = pneg %p104
        %p269 = pneg %p128
        %p270 = pneg %p125
        %p271 = pneg %p154
        %p272 = pneg %p151
        %s273 = sand.u32 %s141, 1
        %s274 = scalar_lea.sflag [#allocation4], %s273
        %s275 = sand.u32 %s141, 1
        %s276 = smul.addr %s275, 16
        %s277 = scalar_lea.vmem [#allocation8], %s276
        %s278 = smul.u32 2, %s23
        %s279 = smul.u32 2, %s23
        %v280 = vld [vmem:[#allocation5] sm:$0xff]
        %v281 = vld [vmem:[#allocation5 + $0x8] sm:$0xff]
        %v282 = vld [vmem:[#allocation5 + $0x10] sm:$0xff]
        %v283 = vld [vmem:[#allocation5 + $0x18] sm:$0xff]
        %v284 = vld [vmem:[#allocation5 + $0x20] sm:$0xff]
        %v285 = vld [vmem:[#allocation5 + $0x28] sm:$0xff]
        %v286 = vld [vmem:[#allocation5 + $0x30] sm:$0xff]
        %v287 = vld [vmem:[#allocation5 + $0x38] sm:$0xff]
        %v288 = vld [vmem:[#allocation5 + $0x40] sm:$0xff]
        %v289 = vld [vmem:[#allocation5 + $0x48] sm:$0xff]
        %v290 = vld [vmem:[#allocation5 + $0x50] sm:$0xff]
        %v291 = vld [vmem:[#allocation5 + $0x58] sm:$0xff]
        %v292 = vld [vmem:[#allocation5 + $0x60] sm:$0xff]
        %v293 = vld [vmem:[#allocation5 + $0x68] sm:$0xff]
        %v294 = vld [vmem:[#allocation5 + $0x70] sm:$0xff]
        %v295 = vld [vmem:[#allocation5 + $0x78] sm:$0xff]
        %v296 = vld [vmem:[%s2] sm:$0x1]
        %v297 = vld [vmem:[#allocation7] sm:$0xff]
        %v298 = vld [vmem:[#allocation7 + $0x8] sm:$0xff]
        %v299 = vld [vmem:[#allocation7 + $0x10] sm:$0xff]
        %v300 = vld [vmem:[#allocation7 + $0x18] sm:$0xff]
        %v301 = vld [vmem:[#allocation7 + $0x20] sm:$0xff]
        %v302 = vld [vmem:[#allocation7 + $0x28] sm:$0xff]
        %v303 = vld [vmem:[#allocation7 + $0x30] sm:$0xff]
        %v304 = vld [vmem:[#allocation7 + $0x38] sm:$0xff]
        %v305 = vld [vmem:[#allocation7 + $0x40] sm:$0xff]
        %v306 = vld [vmem:[#allocation7 + $0x48] sm:$0xff]
        %v307 = vld [vmem:[#allocation7 + $0x50] sm:$0xff]
        %v308 = vld [vmem:[#allocation7 + $0x58] sm:$0xff]
        %v309 = vld [vmem:[#allocation7 + $0x60] sm:$0xff]
        %v310 = vld [vmem:[#allocation7 + $0x68] sm:$0xff]
        %v311 = vld [vmem:[#allocation7 + $0x70] sm:$0xff]
        %v312 = vld [vmem:[#allocation7 + $0x78] sm:$0xff]
        %v313 = vld [vmem:[%s4] sm:$0x1]
        %v314 = vld [vmem:[%s240] sm:$0xff]
        %v315 = vld [vmem:[%s240 + $0x8] sm:$0xff]
        %v317 = vperm.slane %v296, 0
        %319 = vmatpush.msra.mxu0 %v295
        %320 = vmatpush.msra.mxu0 %v294
        %321 = vmatpush.msra.mxu0 %v293
        %322 = vmatpush.msra.mxu0 %v292
        %323 = vmatpush.msra.mxu0 %v291
        %324 = vmatpush.msra.mxu0 %v290
        %325 = vmatpush.msra.mxu0 %v289
        %326 = vmatpush.msra.mxu0 %v288
        %327 = vmatpush.msra.mxu0 %v287
        %328 = vmatpush.msra.mxu0 %v286
        %329 = vmatpush.msra.mxu0 %v285
        %330 = vmatpush.msra.mxu0 %v284
        %331 = vmatpush.msra.mxu0 %v283
        %332 = vmatpush.msra.mxu0 %v282
        %333 = vmatpush.msra.mxu0 %v281
        %334 = vmatpush.msra.mxu0 %v280
        %335 = vmatmul.f32.gmra.mxu0 %v314
        %v336 = vpop.f32.mrf.mxu0
        %v337 = vadd.f32 %v317, %v336
        %338 = vmatmul.f32.gmra.mxu0 %v315
        %v339 = vpop.f32.mrf.mxu0
        %v340 = vadd.f32 %v317, %v339
        %341 = vdwg.mxu0
        %v342 = vmax.f32 %v337, 0.0
        %v343 = vmax.f32 %v340, 0.0
        %v345 = vperm.slane %v313, 0
        %347 = vmatpush.msra.mxu0 %v312
        %348 = vmatpush.msra.mxu0 %v311
        %349 = vmatpush.msra.mxu0 %v310
        %350 = vmatpush.msra.mxu0 %v309
        %351 = vmatpush.msra.mxu0 %v308
        %352 = vmatpush.msra.mxu0 %v307
        %353 = vmatpush.msra.mxu0 %v306
        %354 = vmatpush.msra.mxu0 %v305
        %355 = vmatpush.msra.mxu0 %v304
        %356 = vmatpush.msra.mxu0 %v303
        %357 = vmatpush.msra.mxu0 %v302
        %358 = vmatpush.msra.mxu0 %v301
        %359 = vmatpush.msra.mxu0 %v300
        %360 = vmatpush.msra.mxu0 %v299
        %361 = vmatpush.msra.mxu0 %v298
        %362 = vmatpush.msra.mxu0 %v297
        %363 = vmatmul.f32.gmra.mxu0 %v342
        %v364 = vpop.f32.mrf.mxu0
        %v365 = vadd.f32 %v345, %v364
        %366 = vmatmul.f32.gmra.mxu0 %v343
        %v367 = vpop.f32.mrf.mxu0
        %v368 = vadd.f32 %v345, %v367
        %369 = vdwg.mxu0
        %370 = vst [vmem:[%s277] sm:$0xff] %v365
        %371 = vst [vmem:[%s277 + $0x8] sm:$0xff] %v368
        %s372 = sand.u32 %s141, 1
        %s373 = scalar_lea.sflag [#allocation4], %s372
        %s374 = sand.u32 %s141, 1
        %s375 = smul.addr %s374, 16
        %s376 = scalar_lea.vmem [#allocation8], %s375
        // Predicated region
        $region53: #{tpu_custom_call.1} parent=39 // pred_check
          %p377 = pneg %p151
        $region54: #{tpu_custom_call.1} parent=39 // pred_check_branch
          %379 = sbr.rel (%p377) target = $region56
        $region55: #{tpu_custom_call.1} parent=39 // pred_region
          %s380 = smul.u32 2, %s23
          %382 = vsyncadd %s373, 0
          %s383 = smul.addr %s380, 8
          %s384 = scalar_lea.hbm %s5, %s383
          %s385 = sshll.u32 %s376, 4
          %s386 = int_to_ptr.vmem [resolvable:$true] %s385
          %s387 = sshll.u32 %s384, 4
          %s388 = int_to_ptr.hbm [resolvable:$true] %s387
          %393 = dma.vmem_to_hbm [thread:$0]  %s386, 256, %s388, %s373, 128, 128, 8
        $region56: #{tpu_custom_call.1} parent=39 // pred_fallthru
          _
      $region40: #{tpu_custom_call.1} parent=5 // pred_fallthru
        _
      %p394 = scmp.le.s32.totalorder 2, %s18
      // Predicated region
      $region57: #{tpu_custom_call.1} parent=5 // pred_check
        %p395 = pneg %p394
      $region58: #{tpu_custom_call.1} parent=5 // pred_check_branch
        %397 = sbr.rel (%p395) target = $region60
      $region59: #{tpu_custom_call.1} parent=5 // pred_region
        %s398 = ssub.s32 %s18, 2
        // Predicated region
        $region61: #{tpu_custom_call.1} parent=59 // pred_check
          %p399 = pneg %p157
        $region62: #{tpu_custom_call.1} parent=59 // pred_check_branch
          %401 = sbr.rel (%p399) target = $region64
        $region63: #{tpu_custom_call.1} parent=59 // pred_region
          %s402 = sand.u32 %s142, 1
          %s403 = scalar_lea.sflag [#allocation4], %s402
          %s404 = sand.u32 %s142, 1
          %s405 = smul.addr %s404, 16
          %s406 = scalar_lea.vmem [#allocation8], %s405
          %408 = dma.done %s403, 256
        $region64: #{tpu_custom_call.1} parent=59 // pred_fallthru
          _
      $region60: #{tpu_custom_call.1} parent=5 // pred_fallthru
        _
    $region6: #{tpu_custom_call.1} parent=1 // loop_footer
      %s22 = sadd.s32 1, %s18
    $region7: #{tpu_custom_call.1} parent=1 // loop_footer_branch
      %17 = sbr.rel target = $region3
    $region8: #{tpu_custom_call.1} parent=1 // loop_exit
      _
    %409 = vsyncpa [#allocation3], 1
    %s410 = scalar_lea.sflag [#allocation3], 1
    %411 = vsyncpa %s410, 1
    %412 = vsyncpa [#allocation6], 1
    %413 = vsyncpa [#allocation4], 1
    %s414 = scalar_lea.sflag [#allocation4], 1
    %415 = vsyncpa %s414, 1

</llo_original>
